<compile_context>
chip_gen: v6e
topology: v6e:2x2x1
jax: 0.10.0
libtpu: 0.0.40
codegen_flags: <defaults>
</compile_context>

<pallas_src>
import functools

import jax
import jax.numpy as jnp
from jax.experimental import pallas as pl
from jax.experimental.pallas import tpu as pltpu


def _lwf_loss_kernel(curr_ref, orig_ref, tgt_ref, out_ref, sse_ref, ce_ref,
                     *, n_valid, tile_n, weight):
    i = pl.program_id(0)

    @pl.when(i == 0)
    def _init():
        sse_ref[...] = jnp.zeros_like(sse_ref)
        ce_ref[...] = jnp.zeros_like(ce_ref)

    curr = curr_ref[...].astype(jnp.float32)     # (TN, C_new)
    orig = orig_ref[...].astype(jnp.float32)     # (TN, C_old)  -- unpadded
    tgt = tgt_ref[...]                           # (TN, 1) int32

    tn, c_new = curr.shape
    c_old = orig.shape[1]

    # Valid-row mask for the (possibly ragged) last tile.
    row_ids = i * tile_n + jax.lax.broadcasted_iota(jnp.int32, (tn, 1), 0)
    valid = row_ids < n_valid                                    # (TN, 1) bool

    # ---- MSE partial: sum over valid rows of (curr - zero_pad(orig))^2 ----
    diff = curr[:, :c_old] - orig                                # (TN, C_old)
    sq_rows = jnp.sum(diff * diff, axis=1, keepdims=True)        # (TN, 1)
    if c_old < c_new:                                            # static branch
        tail = curr[:, c_old:]                                   # padded region
        sq_rows = sq_rows + jnp.sum(tail * tail, axis=1, keepdims=True)
    sse_ref[...] += jnp.sum(jnp.where(valid, sq_rows, 0.0), keepdims=True)

    # ---- Cross-entropy partial: sum over valid rows of (lse - logit[target]) ----
    row_max = jnp.max(curr, axis=1, keepdims=True)               # (TN, 1)
    shifted = curr - row_max
    lse = jnp.log(jnp.sum(jnp.exp(shifted), axis=1, keepdims=True))
    cols = jax.lax.broadcasted_iota(jnp.int32, (tn, c_new), 1)   # (TN, C_new)
    picked = jnp.sum(jnp.where(cols == tgt, shifted, 0.0),
                     axis=1, keepdims=True)                      # (TN, 1)
    ce_ref[...] += jnp.sum(jnp.where(valid, lse - picked, 0.0), keepdims=True)

    @pl.when(i == pl.num_programs(0) - 1)
    def _finalize():
        mse = sse_ref[...] / jnp.float32(n_valid * c_new)
        ce = ce_ref[...] / jnp.float32(n_valid)
        out_ref[...] = jnp.float32(weight) * ce + mse


def lwf_loss(current_prediction, original_prediction, target, weight=1.0,
             tile_n=None):
    """current_prediction: (N, C_new), original_prediction: (N, C_old), target: (N,) int."""
    n, c_new = current_prediction.shape
    c_old = original_prediction.shape[1]
    assert c_old <= c_new

    # glue: 2-D int32 targets so the class index lives on the lane axis.
    tgt = target.astype(jnp.int32).reshape(n, 1)

    # Tile sizing: ~2 MiB per input buffer (double-buffered by Pallas), which
    # keeps total VMEM well under the 64 MiB v7x budget while staying large
    # enough (>=~1 MiB) to sit near the HBM roofline on v5e/v6e.
    itemsize = jnp.dtype(current_prediction.dtype).itemsize
    if tile_n is None:
        budget = 2 * 1024 * 1024
        tile_n = max(8, budget // max(1, c_new * itemsize))
    if tile_n >= n:
        tn = n                        # full array dim -> always legal block
    else:
        tn = max(8, (tile_n // 8) * 8)  # sublane-aligned
    grid = (pl.cdiv(n, tn),)

    kernel = functools.partial(
        _lwf_loss_kernel, n_valid=n, tile_n=tn, weight=float(weight))
    # TODO(synk): if `weight` varies at runtime, pass it as an SMEM scalar to
    # avoid recompiles; it is a static hyperparameter in the reference module.

    out = pl.pallas_call(
        kernel,
        out_shape=jax.ShapeDtypeStruct((1, 1), jnp.float32),
        grid=grid,
        in_specs=[
            pl.BlockSpec((tn, c_new), lambda i: (i, 0)),
            pl.BlockSpec((tn, c_old), lambda i: (i, 0)),
            pl.BlockSpec((tn, 1), lambda i: (i, 0)),
        ],
        out_specs=pl.BlockSpec((1, 1), lambda i: (0, 0)),
        scratch_shapes=[
            pltpu.VMEM((1, 1), jnp.float32),   # running sum of squared diffs
            pltpu.VMEM((1, 1), jnp.float32),   # running sum of CE terms
        ],
        compiler_params=pltpu.CompilerParams(
            dimension_semantics=("arbitrary",),      # reduction axis
            vmem_limit_bytes=32 * 1024 * 1024,
        ),
    )(current_prediction, original_prediction, tgt)
    return out[0, 0]


def _reference(current_prediction, original_prediction, target, weight=1.0):
    n, c_new = current_prediction.shape
    c_old = original_prediction.shape[1]
    cp = current_prediction.astype(jnp.float32)
    op = original_prediction.astype(jnp.float32)
    orig_pad = jnp.pad(op, ((0, 0), (0, c_new - c_old)))
    mse = jnp.mean((cp - orig_pad) ** 2)
    logp = jax.nn.log_softmax(cp, axis=1)
    ce = -jnp.mean(logp[jnp.arange(n), target])
    return weight * ce + mse


if __name__ == "__main__":
    key = jax.random.PRNGKey(0)
    k1, k2, k3, k4, k5, k6 = jax.random.split(key, 6)

    # --- Case 1: small single-tile problem (module's natural small shapes) ---
    N, C_NEW, C_OLD = 8, 32, 16
    current_prediction = jax.random.normal(k1, (N, C_NEW), dtype=jnp.float32)
    original_prediction = jax.random.normal(k2, (N, C_OLD), dtype=jnp.float32)
    target = jax.random.randint(k3, (N,), 0, C_NEW, dtype=jnp.int32)

    loss = lwf_loss(current_prediction, original_prediction, target, weight=1.0)
    jax.block_until_ready(loss)
    ref = _reference(current_prediction, original_prediction, target, weight=1.0)
    assert jnp.allclose(loss, ref, rtol=1e-5, atol=1e-5), (loss, ref)

    # --- Case 2: multi-tile grid with a ragged last tile (exercises masking) ---
    N2, C2_NEW, C2_OLD = 20, 32, 16
    cp2 = jax.random.normal(k4, (N2, C2_NEW), dtype=jnp.float32)
    op2 = jax.random.normal(k5, (N2, C2_OLD), dtype=jnp.float32)
    tg2 = jax.random.randint(k6, (N2,), 0, C2_NEW, dtype=jnp.int32)

    loss2 = lwf_loss(cp2, op2, tg2, weight=0.5, tile_n=8)   # grid=(3,), ragged tail
    jax.block_until_ready(loss2)
    ref2 = _reference(cp2, op2, tg2, weight=0.5)
    assert jnp.allclose(loss2, ref2, rtol=1e-5, atol=1e-5), (loss2, ref2)

    print("KERNEL_OK")
</pallas_src>

<mosaic_0001>
module attributes {stable_mosaic.version = 11 : i64} {
  func.func @_lwf_loss_kernel(%arg0: i32, %arg1: memref<8x32xf32, #tpu.memory_space<vmem>>, %arg2: memref<8x16xf32, #tpu.memory_space<vmem>>, %arg3: memref<8x1xi32, #tpu.memory_space<vmem>>, %arg4: memref<1x1xf32, #tpu.memory_space<vmem>>, %arg5: memref<1x1xf32, #tpu.memory_space<vmem>>, %arg6: memref<1x1xf32, #tpu.memory_space<vmem>>) attributes {dimension_semantics = [#tpu.dimension_semantics<arbitrary>], iteration_bounds = array<i64: 1>, scalar_prefetch = 0 : i64, scratch_operands = 2 : i64, tpu.core_type = #tpu.core_type<tc>, window_params = [{transform_indices = @transform_0, window_bounds = array<i64: 8, 32>}, {transform_indices = @transform_1, window_bounds = array<i64: 8, 16>}, {transform_indices = @transform_2, window_bounds = array<i64: 8, 1>}, {pipeline_mode = #tpu.pipeline_mode<synchronous>, transform_indices = @transform_3, window_bounds = array<i64: 1, 1>}]} {
    %c0_i32 = arith.constant 0 : i32
    %0 = arith.cmpi eq, %arg0, %c0_i32 : i32
    %1 = arith.extui %0 : i1 to i32
    %c0_i32_0 = arith.constant 0 : i32
    %2 = arith.cmpi ne, %1, %c0_i32_0 : i32
    scf.if %2 {
      %cst_26 = arith.constant 0.000000e+00 : f32
      %61 = vector.broadcast %cst_26 : f32 to vector<1x1xf32>
      %c0_27 = arith.constant 0 : index
      %c0_28 = arith.constant 0 : index
      %62 = vector.load %arg5[%c0_27, %c0_28] : memref<1x1xf32, #tpu.memory_space<vmem>>, vector<1x1xf32>
      tpu.vector_store %arg5[%c0_27, %c0_28], %61 {strides = array<i32>} : memref<1x1xf32, #tpu.memory_space<vmem>>, vector<1x1xf32>,
      %cst_29 = arith.constant 0.000000e+00 : f32
      %63 = vector.broadcast %cst_29 : f32 to vector<1x1xf32>
      %c0_30 = arith.constant 0 : index
      %c0_31 = arith.constant 0 : index
      %64 = vector.load %arg6[%c0_30, %c0_31] : memref<1x1xf32, #tpu.memory_space<vmem>>, vector<1x1xf32>
      tpu.vector_store %arg6[%c0_30, %c0_31], %63 {strides = array<i32>} : memref<1x1xf32, #tpu.memory_space<vmem>>, vector<1x1xf32>,
    } else {
    }
    %c0 = arith.constant 0 : index
    %c0_1 = arith.constant 0 : index
    %3 = vector.load %arg1[%c0, %c0_1] : memref<8x32xf32, #tpu.memory_space<vmem>>, vector<8x32xf32>
    %c0_2 = arith.constant 0 : index
    %c0_3 = arith.constant 0 : index
    %4 = vector.load %arg2[%c0_2, %c0_3] : memref<8x16xf32, #tpu.memory_space<vmem>>, vector<8x16xf32>
    %c0_4 = arith.constant 0 : index
    %c0_5 = arith.constant 0 : index
    %5 = vector.load %arg3[%c0_4, %c0_5] : memref<8x1xi32, #tpu.memory_space<vmem>>, vector<8x1xi32>
    %c8_i32 = arith.constant 8 : i32
    %6 = arith.muli %arg0, %c8_i32 : i32
    %7 = tpu.iota {dimensions = array<i32: 0>} : vector<8x1xi32>
    %8 = vector.broadcast %6 : i32 to vector<8x1xi32>
    %9 = arith.addi %8, %7 : vector<8x1xi32>
    %c8_i32_6 = arith.constant 8 : i32
    %10 = vector.broadcast %c8_i32_6 : i32 to vector<8x1xi32>
    %11 = arith.cmpi slt, %9, %10 : vector<8x1xi32>
    %12 = vector.extract_strided_slice %3 {offsets = [0, 0], sizes = [8, 16], strides = [1, 1]} : vector<8x32xf32> to vector<8x16xf32>
    %13 = arith.subf %12, %4 : vector<8x16xf32>
    %14 = arith.mulf %13, %13 : vector<8x16xf32>
    %cst = arith.constant dense<0.000000e+00> : vector<8xf32>
    %15 = vector.multi_reduction <add>, %14, %cst [1] : vector<8x16xf32> to vector<8xf32>
    %16 = vector.shape_cast %15 : vector<8xf32> to vector<8x1xf32>
    %17 = vector.extract_strided_slice %3 {offsets = [0, 16], sizes = [8, 16], strides = [1, 1]} : vector<8x32xf32> to vector<8x16xf32>
    %18 = arith.mulf %17, %17 : vector<8x16xf32>
    %cst_7 = arith.constant dense<0.000000e+00> : vector<8xf32>
    %19 = vector.multi_reduction <add>, %18, %cst_7 [1] : vector<8x16xf32> to vector<8xf32>
    %20 = vector.shape_cast %19 : vector<8xf32> to vector<8x1xf32>
    %21 = arith.addf %16, %20 : vector<8x1xf32>
    %c0_8 = arith.constant 0 : index
    %c0_9 = arith.constant 0 : index
    %22 = vector.load %arg5[%c0_8, %c0_9] : memref<1x1xf32, #tpu.memory_space<vmem>>, vector<1x1xf32>
    %cst_10 = arith.constant 0.000000e+00 : f32
    %23 = vector.broadcast %cst_10 : f32 to vector<8x1xf32>
    %24 = arith.select %11, %21, %23 : vector<8x1xi1>, vector<8x1xf32>
    %25 = vector.shape_cast %24 : vector<8x1xf32> to vector<1x8x1xf32>
    %cst_11 = arith.constant dense<0.000000e+00> : vector<1xf32>
    %26 = vector.multi_reduction <add>, %25, %cst_11 [1, 2] : vector<1x8x1xf32> to vector<1xf32>
    %27 = vector.shape_cast %26 : vector<1xf32> to vector<1x1x1xf32>
    %28 = vector.extract %27[0, 0, 0] : f32 from vector<1x1x1xf32>
    %29 = vector.broadcast %28 : f32 to vector<1x1xf32>
    %30 = arith.addf %22, %29 : vector<1x1xf32>
    %c0_12 = arith.constant 0 : index
    %c0_13 = arith.constant 0 : index
    %31 = vector.load %arg5[%c0_12, %c0_13] : memref<1x1xf32, #tpu.memory_space<vmem>>, vector<1x1xf32>
    tpu.vector_store %arg5[%c0_12, %c0_13], %30 {strides = array<i32>} : memref<1x1xf32, #tpu.memory_space<vmem>>, vector<1x1xf32>,
    %cst_14 = arith.constant dense<0xFF800000> : vector<8xf32>
    %32 = vector.multi_reduction <maximumf>, %3, %cst_14 [1] : vector<8x32xf32> to vector<8xf32>
    %33 = vector.shape_cast %32 : vector<8xf32> to vector<8x1xf32>
    %34 = vector.broadcast %33 : vector<8x1xf32> to vector<8x32xf32>
    %35 = arith.subf %3, %34 : vector<8x32xf32>
    %36 = math.exp %35 : vector<8x32xf32>
    %cst_15 = arith.constant dense<0.000000e+00> : vector<8xf32>
    %37 = vector.multi_reduction <add>, %36, %cst_15 [1] : vector<8x32xf32> to vector<8xf32>
    %38 = vector.shape_cast %37 : vector<8xf32> to vector<8x1xf32>
    %39 = math.log %38 : vector<8x1xf32>
    %40 = tpu.iota {dimensions = array<i32: 1>} : vector<8x32xi32>
    %41 = vector.broadcast %5 : vector<8x1xi32> to vector<8x32xi32>
    %42 = arith.cmpi eq, %40, %41 : vector<8x32xi32>
    %cst_16 = arith.constant 0.000000e+00 : f32
    %43 = vector.broadcast %cst_16 : f32 to vector<8x32xf32>
    %44 = arith.select %42, %35, %43 : vector<8x32xi1>, vector<8x32xf32>
    %cst_17 = arith.constant dense<0.000000e+00> : vector<8xf32>
    %45 = vector.multi_reduction <add>, %44, %cst_17 [1] : vector<8x32xf32> to vector<8xf32>
    %46 = vector.shape_cast %45 : vector<8xf32> to vector<8x1xf32>
    %c0_18 = arith.constant 0 : index
    %c0_19 = arith.constant 0 : index
    %47 = vector.load %arg6[%c0_18, %c0_19] : memref<1x1xf32, #tpu.memory_space<vmem>>, vector<1x1xf32>
    %48 = arith.subf %39, %46 : vector<8x1xf32>
    %cst_20 = arith.constant 0.000000e+00 : f32
    %49 = vector.broadcast %cst_20 : f32 to vector<8x1xf32>
    %50 = arith.select %11, %48, %49 : vector<8x1xi1>, vector<8x1xf32>
    %51 = vector.shape_cast %50 : vector<8x1xf32> to vector<1x8x1xf32>
    %cst_21 = arith.constant dense<0.000000e+00> : vector<1xf32>
    %52 = vector.multi_reduction <add>, %51, %cst_21 [1, 2] : vector<1x8x1xf32> to vector<1xf32>
    %53 = vector.shape_cast %52 : vector<1xf32> to vector<1x1x1xf32>
    %54 = vector.extract %53[0, 0, 0] : f32 from vector<1x1x1xf32>
    %55 = vector.broadcast %54 : f32 to vector<1x1xf32>
    %56 = arith.addf %47, %55 : vector<1x1xf32>
    %c0_22 = arith.constant 0 : index
    %c0_23 = arith.constant 0 : index
    %57 = vector.load %arg6[%c0_22, %c0_23] : memref<1x1xf32, #tpu.memory_space<vmem>>, vector<1x1xf32>
    tpu.vector_store %arg6[%c0_22, %c0_23], %56 {strides = array<i32>} : memref<1x1xf32, #tpu.memory_space<vmem>>, vector<1x1xf32>,
    %c0_i32_24 = arith.constant 0 : i32
    %58 = arith.cmpi eq, %arg0, %c0_i32_24 : i32
    %59 = arith.extui %58 : i1 to i32
    %c0_i32_25 = arith.constant 0 : i32
    %60 = arith.cmpi ne, %59, %c0_i32_25 : i32
    scf.if %60 {
      %c0_26 = arith.constant 0 : index
      %c0_27 = arith.constant 0 : index
      %61 = vector.load %arg5[%c0_26, %c0_27] : memref<1x1xf32, #tpu.memory_space<vmem>>, vector<1x1xf32>
      %cst_28 = arith.constant 2.560000e+02 : f32
      %62 = vector.broadcast %cst_28 : f32 to vector<1x1xf32>
      %63 = arith.divf %61, %62 : vector<1x1xf32>
      %c0_29 = arith.constant 0 : index
      %c0_30 = arith.constant 0 : index
      %64 = vector.load %arg6[%c0_29, %c0_30] : memref<1x1xf32, #tpu.memory_space<vmem>>, vector<1x1xf32>
      %cst_31 = arith.constant 8.000000e+00 : f32
      %65 = vector.broadcast %cst_31 : f32 to vector<1x1xf32>
      %66 = arith.divf %64, %65 : vector<1x1xf32>
      %cst_32 = arith.constant 1.000000e+00 : f32
      %67 = vector.broadcast %cst_32 : f32 to vector<1x1xf32>
      %68 = arith.mulf %67, %66 : vector<1x1xf32>
      %69 = arith.addf %68, %63 : vector<1x1xf32>
      %c0_33 = arith.constant 0 : index
      %c0_34 = arith.constant 0 : index
      %70 = vector.load %arg4[%c0_33, %c0_34] : memref<1x1xf32, #tpu.memory_space<vmem>>, vector<1x1xf32>
      tpu.vector_store %arg4[%c0_33, %c0_34], %69 {strides = array<i32>} : memref<1x1xf32, #tpu.memory_space<vmem>>, vector<1x1xf32>,
    } else {
    }
    return
  }
  func.func @transform_0(%arg0: i32) -> (i32, i32) {
    %c0_i32 = arith.constant 0 : i32
    %c0_i32_0 = arith.constant 0 : i32
    return %arg0, %c0_i32 : i32, i32
  }
  func.func @transform_1(%arg0: i32) -> (i32, i32) {
    %c0_i32 = arith.constant 0 : i32
    %c0_i32_0 = arith.constant 0 : i32
    return %arg0, %c0_i32 : i32, i32
  }
  func.func @transform_2(%arg0: i32) -> (i32, i32) {
    %c0_i32 = arith.constant 0 : i32
    %c0_i32_0 = arith.constant 0 : i32
    return %arg0, %c0_i32 : i32, i32
  }
  func.func @transform_3(%arg0: i32) -> (i32, i32) {
    %c0_i32 = arith.constant 0 : i32
    %c0_i32_0 = arith.constant 0 : i32
    %c0_i32_1 = arith.constant 0 : i32
    return %c0_i32, %c0_i32_0 : i32, i32
  }
}

</mosaic_0001>

<llo_original>
// kernel: tpu_custom_call.1
$region0: #{tpu_custom_call.1}
  #allocation0 [shape = 'u32[]', space=smem, size = 0x4, offset = 0x4, fixed_abs, tag = 'smem constant byte address 0x4 - core index']
  #allocation1 [shape = 'u32[144,128]{1,0:T(1,128)}', space=vmem, size = 0x12000, scoped, tag = 'internal scratch']
  #allocation2 [shape = 'f32[1,1]{1,0:T(1,128)}', space=vmem, size = 0x200, scoped, tag = 'scratch operand']
  #allocation3 [shape = 'f32[1,1]{1,0:T(1,128)}', space=vmem, size = 0x200, scoped, tag = 'scratch operand']
  %s0 = inlined_call_operand.vmem [shape: f32[8,32], index: 0, kind: input, shape index: {}]
  %s1 = inlined_call_operand.hbm [shape: f32[8,16], index: 1, kind: input, shape index: {}]
  %s2 = inlined_call_operand.vmem [shape: s32[8,1], index: 2, kind: input, shape index: {}]
  %s3 = inlined_call_operand.hbm [shape: f32[1,1], index: 3, kind: output, shape index: {}]
  %s4 = sld [smem:[#allocation0]]
  $region34: #{tpu_custom_call.1} parent=0
    _
  %s6 = ssub.s32 1, %s4
  %s7 = scalar_select 0, %s6, %s4
  $region1: #{tpu_custom_call.1} parent=0
    #allocation4 [shape = 'u8[4096]{0}', space=vmem, size = 0x1000, scoped, tag = 'input window, operand 1, single buffered']
    #allocation5 [shape = 's32[1]{0}', space=sflag, size = 0x4, scoped, tag = 'scoped memory for tpu_custom_call.1']
    #allocation6 [shape = 's32[1]{0}', space=sflag, size = 0x4, scoped, tag = 'scoped memory for tpu_custom_call.1']
    #allocation7 [shape = 'u8[512]{0}', space=vmem, size = 0x400, scoped, tag = 'output window, operand 0, single buffered']
    %8 = vsyncpa [#allocation5], 0
    %9 = vsyncpa [#allocation6], 0
    // Predicated region
    $region2: #{tpu_custom_call.1} parent=1 // pred_check
      _
    $region3: #{tpu_custom_call.1} parent=1 // pred_check_branch
      %11 = sbr.rel (0) target = $region5
    $region4: #{tpu_custom_call.1} parent=1 // pred_region
      _
    $region5: #{tpu_custom_call.1} parent=1 // pred_fallthru
      _
    // Predicated region
    $region6: #{tpu_custom_call.1} parent=1 // pred_check
      _
    $region7: #{tpu_custom_call.1} parent=1 // pred_check_branch
      %13 = sbr.rel (0) target = $region9
    $region8: #{tpu_custom_call.1} parent=1 // pred_region
      %s15 = ssub.s32 128, 128
      %16 = vsyncadd [#allocation5], %s15
      %s18 = sshll.u32 [#allocation4], 4
      %s19 = int_to_ptr.vmem [resolvable:$true] %s18
      %21 = dma.hbm_to_vmem [thread:$0]  %s1, 128, %s19, [#allocation5]
    $region9: #{tpu_custom_call.1} parent=1 // pred_fallthru
      _
    // Predicated region
    $region10: #{tpu_custom_call.1} parent=1 // pred_check
      _
    $region11: #{tpu_custom_call.1} parent=1 // pred_check_branch
      %23 = sbr.rel (0) target = $region13
    $region12: #{tpu_custom_call.1} parent=1 // pred_region
      _
    $region13: #{tpu_custom_call.1} parent=1 // pred_fallthru
      _
    // Predicated region
    $region14: #{tpu_custom_call.1} parent=1 // pred_check
      _
    $region15: #{tpu_custom_call.1} parent=1 // pred_check_branch
      %25 = sbr.rel (0) target = $region17
    $region16: #{tpu_custom_call.1} parent=1 // pred_region
      %26 = dma.done [#allocation5], 128
    $region17: #{tpu_custom_call.1} parent=1 // pred_fallthru
      _
    %p27 = scmp.eq.s32.totalorder 0, 0
    // Predicated region
    $region18: #{tpu_custom_call.1} parent=1 // pred_check
      %p28 = pneg %p27
    $region19: #{tpu_custom_call.1} parent=1 // pred_check_branch
      %30 = sbr.rel (%p28) target = $region21
    $region20: #{tpu_custom_call.1} parent=1 // pred_region
      %vm31 = vcmask 0
      %32 = vst.msk [vmem:[#allocation2] sm:$0x1] %vm31, 0.0
      %33 = vst.msk [vmem:[#allocation3] sm:$0x1] %vm31, 0.0
    $region21: #{tpu_custom_call.1} parent=1 // pred_fallthru
      _
    %v34 = vld [vmem:[%s0] sm:$0xff]
    %v35 = vld [vmem:[#allocation4] sm:$0xff]
    %v36 = vld [vmem:[%s2] sm:$0xff]
    %s37 = smul.u32 0, 8
    %v38 = vlaneseq
    %v39 = vshrl.u32 %v38, 7
    %v40 = vstv %s37
    %v41 = vadd.s32 %v40, %v39
    %vm42 = vcmp.lt.s32.totalorder %v41, 8
    %v43 = vsub.f32 %v34, %v35
    %v44 = vmul.f32 %v43, %v43
    %vm45 = vcmask 130048
    %v46 = vsel %vm45, %v44, 0.0
    %47 = vadd.xlane.f32.xlu0 %v46
    %v48 = vpop.xlane.xlu0 %47
    %v49 = vmul.f32 %v34, %v34
    %51 = vrot.lane.b32.xlu0 %v49, 112
    %v52 = vpop.permute.xlu0 %51
    %v54 = vsel %vm45, %v52, 0.0
    %55 = vadd.xlane.f32.xlu0 %v54
    %v56 = vpop.xlane.xlu0 %55
    %v57 = vadd.f32 %v48, %v56
    %v58 = vld [vmem:[#allocation2] sm:$0x1]
    %v59 = vsel %vm42, %v57, 0.0
    %vm60 = vcmask 7168
    %v61 = vsel %vm60, %v59, 0.0
    %62 = vadd.xlane.f32.xlu0 %v61
    %v63 = vpop.xlane.xlu0 %62
    %v64 = vrot.slane %v63, 4
    %v65 = vadd.f32 %v63, %v64
    %v66 = vrot.slane %v65, 2
    %v67 = vadd.f32 %v65, %v66
    %v68 = vrot.slane %v67, 1
    %v69 = vadd.f32 %v67, %v68
    %s70 = vtos %v69
    %v71 = vstv %s70
    %v72 = vadd.f32 %v58, %v71
    %vm73 = vcmask 0
    %74 = vst.msk [vmem:[#allocation2] sm:$0x1] %vm73, %v72
    %vm75 = vcmask 261120
    %v76 = vsel %vm75, %v34, -inf
    %77 = vmax.xlane.f32.xlu0 %v76
    %v78 = vpop.xlane.xlu0 %77
    %v79 = vsub.f32 %v34, %v78
    %v80 = vmul.f32 %v79, 1.442695
    %v81 = vpow.pop %v80
    %v82 = vsel %vm75, %v81, 0.0
    %83 = vadd.xlane.f32.xlu0 %v82
    %v84 = vpop.xlane.xlu0 %83
    %v85 = vlog2.pop %v84
    %v86 = vmul.f32 %v85, 0.6931472
    %v87 = vlaneseq
    %v88 = vand.u32 %v87, 127
    %89 = vset.pattern.permute.xlu0 0
    %90 = vperm.xlu0 %89, %v36
    %v91 = vpop.permute.xlu0 %90
    %vm92 = vcmp.eq.s32.totalorder %v88, %v91
    %v93 = vsel %vm92, %v79, 0.0
    %v94 = vsel %vm75, %v93, 0.0
    %95 = vadd.xlane.f32.xlu0 %v94
    %v96 = vpop.xlane.xlu0 %95
    %v97 = vld [vmem:[#allocation3] sm:$0x1]
    %v98 = vsub.f32 %v86, %v96
    %v99 = vsel %vm42, %v98, 0.0
    %v100 = vsel %vm60, %v99, 0.0
    %101 = vadd.xlane.f32.xlu0 %v100
    %v102 = vpop.xlane.xlu0 %101
    %v103 = vrot.slane %v102, 4
    %v104 = vadd.f32 %v102, %v103
    %v105 = vrot.slane %v104, 2
    %v106 = vadd.f32 %v104, %v105
    %v107 = vrot.slane %v106, 1
    %v108 = vadd.f32 %v106, %v107
    %s109 = vtos %v108
    %v110 = vstv %s109
    %v111 = vadd.f32 %v97, %v110
    %112 = vst.msk [vmem:[#allocation3] sm:$0x1] %vm73, %v111
    // Predicated region
    $region22: #{tpu_custom_call.1} parent=1 // pred_check
      %p113 = pneg %p27
    $region23: #{tpu_custom_call.1} parent=1 // pred_check_branch
      %115 = sbr.rel (%p113) target = $region25
    $region24: #{tpu_custom_call.1} parent=1 // pred_region
      %v116 = vld [vmem:[#allocation2] sm:$0x1]
      %v117 = vrcp.pop 256.0
      %v118 = vmul.f32 %v116, %v117
      %v119 = vld [vmem:[#allocation3] sm:$0x1]
      %v120 = vrcp.pop 8.0
      %v121 = vmul.f32 %v119, %v120
      %v122 = vadd.f32 %v121, %v118
      %123 = vst.msk [vmem:[#allocation7] sm:$0x1] %vm73, %v122
    $region25: #{tpu_custom_call.1} parent=1 // pred_fallthru
      _
    // Predicated region
    $region26: #{tpu_custom_call.1} parent=1 // pred_check
      _
    $region27: #{tpu_custom_call.1} parent=1 // pred_check_branch
      %125 = sbr.rel (0) target = $region29
    $region28: #{tpu_custom_call.1} parent=1 // pred_region
      %s127 = ssub.s32 16, 16
      %128 = vsyncadd [#allocation6], %s127
      %s130 = sshll.u32 [#allocation7], 4
      %s131 = int_to_ptr.vmem [resolvable:$true] %s130
      %133 = dma.vmem_to_hbm [thread:$0]  %s131, 16, %s3, [#allocation6]
    $region29: #{tpu_custom_call.1} parent=1 // pred_fallthru
      _
    // Predicated region
    $region30: #{tpu_custom_call.1} parent=1 // pred_check
      _
    $region31: #{tpu_custom_call.1} parent=1 // pred_check_branch
      %135 = sbr.rel (0) target = $region33
    $region32: #{tpu_custom_call.1} parent=1 // pred_region
      %136 = dma.done [#allocation6], 16
    $region33: #{tpu_custom_call.1} parent=1 // pred_fallthru
      _
    %137 = vsyncpa [#allocation5], 1
    %138 = vsyncpa [#allocation6], 1

</llo_original>
